<compile_context>
chip_gen: v5e
topology: v5e:2x2
jax: 0.10.0
libtpu: 0.0.40
codegen_flags: <defaults>
</compile_context>

<pallas_src>
import functools

import jax
import jax.numpy as jnp
from jax.experimental import pallas as pl
from jax.experimental.pallas import tpu as pltpu


def _round_up(n, m):
    return ((n + m - 1) // m) * m


def _sublane_align(dtype):
    # Sub-32-bit dtypes pack 2/4 rows per sublane; align slab sections to the
    # packed tile so static p_ref[a:b, :] slices stay zero-cost views.
    return {4: 8, 2: 16, 1: 32}[jnp.dtype(dtype).itemsize]


def _mlp_kernel(x_ref, w_ref, b_ref, o_ref, *, d_in, r_in, h_pad):
    """Fused (Linear -> ReLU) x3.

    x_ref: [TB, d_in]                 compute dtype (e.g. bf16)
    w_ref: [r_in + 2*h_pad, h_pad]    packed, pre-transposed weight slab:
             rows [0, d_in)                  : W1^T  ([d_in, h_pad])
             rows [r_in, r_in + h_pad)       : W2^T  (zero-padded to [h_pad, h_pad])
             rows [r_in + h_pad, r_in+2h_pad): W3^T  (zero-padded to [h_pad, h_pad])
    b_ref: [8, h_pad] float32, rows 0/1/2 = b1/b2/b3 (lanes beyond hidden are 0)
    o_ref: [TB, h_pad]                lane-dense output (wrapper slices to hidden)
    """
    f32 = jnp.float32
    x = x_ref[...]

    w1 = w_ref[0:d_in, :]                         # [d_in, h_pad]
    w2 = w_ref[r_in:r_in + h_pad, :]              # [h_pad, h_pad]
    w3 = w_ref[r_in + h_pad:r_in + 2 * h_pad, :]  # [h_pad, h_pad]
    b1 = b_ref[0:1, :]
    b2 = b_ref[1:2, :]
    b3 = b_ref[2:3, :]

    # fc1 + relu  (weights already stored [in, out] -> no in-kernel transpose)
    h = jnp.dot(x, w1, preferred_element_type=f32)
    h = jnp.maximum(h + b1, 0.0)
    # fc2 + relu
    h = jnp.dot(h.astype(w2.dtype), w2, preferred_element_type=f32)
    h = jnp.maximum(h + b2, 0.0)
    # fc3 + relu
    h = jnp.dot(h.astype(w3.dtype), w3, preferred_element_type=f32)
    h = jnp.maximum(h + b3, 0.0)

    o_ref[...] = h.astype(o_ref.dtype)


def pack_params(params, *, compute_dtype=jnp.bfloat16):
    """Pack w1/w2/w3 (pre-transposed, 128-lane padded) into one slab; biases
    stay in a separate small f32 array so they are never quantized."""
    w1, b1 = params["w1"], params["b1"]  # [H, d_in], [H]
    w2, b2 = params["w2"], params["b2"]  # [H, H],    [H]
    w3, b3 = params["w3"], params["b3"]  # [H, H],    [H]
    hidden, d_in = w1.shape

    align = _sublane_align(compute_dtype)
    r_in = _round_up(d_in, align)
    h_pad = _round_up(hidden, 128)
    rows = r_in + 2 * h_pad

    slab = jnp.zeros((rows, h_pad), jnp.float32)
    slab = slab.at[0:d_in, 0:hidden].set(w1.T)
    slab = slab.at[r_in:r_in + hidden, 0:hidden].set(w2.T)
    slab = slab.at[r_in + h_pad:r_in + h_pad + hidden, 0:hidden].set(w3.T)
    slab = slab.astype(compute_dtype)

    bias = jnp.zeros((8, h_pad), jnp.float32)
    bias = bias.at[0, 0:hidden].set(b1.astype(jnp.float32))
    bias = bias.at[1, 0:hidden].set(b2.astype(jnp.float32))
    bias = bias.at[2, 0:hidden].set(b3.astype(jnp.float32))
    return slab, bias


def action_encoder_forward(x, params, *, compute_dtype=jnp.bfloat16,
                           block_rows=4096, vmem_budget_bytes=20 * 1024 * 1024):
    """x: [B, input_dim]; params: dict of w1,b1,w2,b2,w3,b3 (PyTorch layout)."""
    out_dtype = x.dtype
    hidden, d_in = params["w1"].shape
    assert x.shape[-1] == d_in
    B = x.shape[0]

    slab, bias = pack_params(params, compute_dtype=compute_dtype)
    align = _sublane_align(compute_dtype)
    r_in = _round_up(d_in, align)
    h_pad = _round_up(hidden, 128)

    in_bytes = jnp.dtype(compute_dtype).itemsize
    out_bytes = jnp.dtype(out_dtype).itemsize

    # Batch tile from a VMEM budget: double-buffered x/out tiles plus ~2 live
    # f32 [tb, h_pad] intermediates; clamp to block_rows and the batch.
    per_row = 2 * d_in * in_bytes + 2 * h_pad * out_bytes + 2 * h_pad * 4
    tb_budget = max(8, (vmem_budget_bytes // per_row) // 8 * 8)
    tb = min(_round_up(B, 8), block_rows, tb_budget)
    # v7x has 2 TensorCores sharing the "parallel" grid axis: ensure >= 2 grid
    # steps whenever the batch is big enough to split.
    if _round_up(B, tb) // tb < 2 and tb > 8:
        tb = max(8, _round_up((tb + 1) // 2, 8))
    b_pad = _round_up(B, tb)

    x_c = x.astype(compute_dtype)
    if b_pad != B:
        x_c = jnp.pad(x_c, ((0, b_pad - B), (0, 0)))

    grid = (b_pad // tb,)
    kernel = functools.partial(_mlp_kernel, d_in=d_in, r_in=r_in, h_pad=h_pad)

    cost = pl.CostEstimate(
        flops=2 * b_pad * (d_in * h_pad + 2 * h_pad * h_pad),
        transcendentals=0,
        bytes_accessed=(
            b_pad * d_in * in_bytes        # read x
            + b_pad * h_pad * out_bytes    # write out (lane-dense)
            + slab.size * in_bytes         # read weight slab once
            + bias.size * 4                # read biases once
        ),
    )

    # Explicit VMEM budget (resident slab/bias + double-buffered tiles +
    # intermediates + slack); keeps us safe under v7x's smaller VMEM.
    vmem_limit = int(
        slab.size * in_bytes + bias.size * 4
        + 2 * tb * d_in * in_bytes
        + 2 * tb * h_pad * out_bytes
        + 4 * tb * h_pad * 4
        + (2 << 20)
    )
    vmem_limit = max(vmem_limit, 16 << 20)

    out = pl.pallas_call(
        kernel,
        out_shape=jax.ShapeDtypeStruct((b_pad, h_pad), out_dtype),
        grid_spec=pltpu.PrefetchScalarGridSpec(
            num_scalar_prefetch=0,
            grid=grid,
            in_specs=[
                pl.BlockSpec((tb, d_in), lambda i: (i, 0)),     # batch-tiled x
                pl.BlockSpec(slab.shape, lambda i: (0, 0)),     # VMEM-resident weights
                pl.BlockSpec(bias.shape, lambda i: (0, 0)),     # VMEM-resident f32 biases
            ],
            out_specs=pl.BlockSpec((tb, h_pad), lambda i: (i, 0)),
        ),
        compiler_params=pltpu.CompilerParams(
            dimension_semantics=("parallel",),   # shard batch grid across TCs (v7x)
            vmem_limit_bytes=vmem_limit,
        ),
        cost_estimate=cost,
    )(x_c, slab, bias)

    return out[:B, :hidden]


def init_params(key, input_dim, hidden_dim):
    """Deterministic init mimicking nn.Linear's uniform(-1/sqrt(fan_in), +)."""
    ks = jax.random.split(key, 6)

    def lin(kw, kb, fan_in, fan_out):
        bound = 1.0 / jnp.sqrt(fan_in)
        w = jax.random.uniform(kw, (fan_out, fan_in), jnp.float32, -bound, bound)
        b = jax.random.uniform(kb, (fan_out,), jnp.float32, -bound, bound)
        return w, b

    w1, b1 = lin(ks[0], ks[1], input_dim, hidden_dim)
    w2, b2 = lin(ks[2], ks[3], hidden_dim, hidden_dim)
    w3, b3 = lin(ks[4], ks[5], hidden_dim, hidden_dim)
    return {"w1": w1, "b1": b1, "w2": w2, "b2": b2, "w3": w3, "b3": b3}


def _reference(x, p):
    h = jnp.maximum(x @ p["w1"].T + p["b1"], 0.0)
    h = jnp.maximum(h @ p["w2"].T + p["b2"], 0.0)
    h = jnp.maximum(h @ p["w3"].T + p["b3"], 0.0)
    return h


if __name__ == "__main__":
    key = jax.random.PRNGKey(0)
    k_x, k_p = jax.random.split(key)

    batch, input_dim, hidden_dim = 8, 16, 32
    x = jax.random.normal(k_x, (batch, input_dim), jnp.float32)
    params = init_params(k_p, input_dim, hidden_dim)

    ref = _reference(x, params)

    # Exact-match f32 compute path.
    out_f32 = jax.block_until_ready(
        action_encoder_forward(x, params, compute_dtype=jnp.float32))
    assert out_f32.shape == (batch, hidden_dim)
    assert jnp.allclose(out_f32, ref, atol=1e-5, rtol=1e-5), "f32 mismatch vs reference"

    # Default bf16 fast path (f32 accumulate / f32 biases / f32 ReLU).
    out_bf16 = jax.block_until_ready(action_encoder_forward(x, params))
    assert out_bf16.shape == (batch, hidden_dim)
    assert jnp.allclose(out_bf16, ref, atol=5e-2, rtol=5e-2), "bf16 mismatch vs reference"

    print("KERNEL_OK")
</pallas_src>

<mosaic_0001>
module attributes {stable_mosaic.version = 11 : i64} {
  func.func @_mlp_kernel(%arg0: i32, %arg1: memref<8x16xf32, #tpu.memory_space<vmem>>, %arg2: memref<272x128xf32, #tpu.memory_space<vmem>>, %arg3: memref<8x128xf32, #tpu.memory_space<vmem>>, %arg4: memref<8x128xf32, #tpu.memory_space<vmem>>) attributes {dimension_semantics = [#tpu.dimension_semantics<parallel>], iteration_bounds = array<i64: 1>, scalar_prefetch = 0 : i64, scratch_operands = 0 : i64, tpu.core_type = #tpu.core_type<tc>, window_params = [{transform_indices = @transform_0, window_bounds = array<i64: 8, 16>}, {pipeline_mode = #tpu.pipeline_mode<synchronous>, transform_indices = @transform_1, window_bounds = array<i64: 272, 128>}, {pipeline_mode = #tpu.pipeline_mode<synchronous>, transform_indices = @transform_2, window_bounds = array<i64: 8, 128>}, {transform_indices = @transform_3, window_bounds = array<i64: 8, 128>}]} {
    %c0 = arith.constant 0 : index
    %c0_0 = arith.constant 0 : index
    %0 = vector.load %arg1[%c0, %c0_0] : memref<8x16xf32, #tpu.memory_space<vmem>>, vector<8x16xf32>
    %c0_1 = arith.constant 0 : index
    %c0_2 = arith.constant 0 : index
    %1 = vector.load %arg2[%c0_1, %c0_2] : memref<272x128xf32, #tpu.memory_space<vmem>>, vector<16x128xf32>
    %c16 = arith.constant 16 : index
    %c0_3 = arith.constant 0 : index
    %2 = vector.load %arg2[%c16, %c0_3] : memref<272x128xf32, #tpu.memory_space<vmem>>, vector<128x128xf32>
    %c144 = arith.constant 144 : index
    %c0_4 = arith.constant 0 : index
    %3 = vector.load %arg2[%c144, %c0_4] : memref<272x128xf32, #tpu.memory_space<vmem>>, vector<128x128xf32>
    %c0_5 = arith.constant 0 : index
    %c0_6 = arith.constant 0 : index
    %4 = vector.load %arg3[%c0_5, %c0_6] : memref<8x128xf32, #tpu.memory_space<vmem>>, vector<1x128xf32>
    %c1 = arith.constant 1 : index
    %c0_7 = arith.constant 0 : index
    %5 = vector.load %arg3[%c1, %c0_7] : memref<8x128xf32, #tpu.memory_space<vmem>>, vector<1x128xf32>
    %c2 = arith.constant 2 : index
    %c0_8 = arith.constant 0 : index
    %6 = vector.load %arg3[%c2, %c0_8] : memref<8x128xf32, #tpu.memory_space<vmem>>, vector<1x128xf32>
    %cst = arith.constant dense<0.000000e+00> : vector<8x128xf32>
    %7 = tpu.matmul %0, %1, %cst {dimension_numbers = #tpu.dot_dimension_numbers<[1], [0], [0], [1], [0, 0, 1, 1], [], []>} : vector<8x16xf32>, vector<16x128xf32>, vector<8x128xf32> -> vector<8x128xf32>
    %8 = vector.broadcast %4 : vector<1x128xf32> to vector<8x128xf32>
    %9 = arith.addf %7, %8 : vector<8x128xf32>
    %cst_9 = arith.constant 0.000000e+00 : f32
    %10 = vector.broadcast %cst_9 : f32 to vector<8x128xf32>
    %11 = arith.maximumf %9, %10 : vector<8x128xf32>
    %cst_10 = arith.constant dense<0.000000e+00> : vector<8x128xf32>
    %12 = tpu.matmul %11, %2, %cst_10 {dimension_numbers = #tpu.dot_dimension_numbers<[1], [0], [0], [1], [0, 0, 1, 1], [], []>} : vector<8x128xf32>, vector<128x128xf32>, vector<8x128xf32> -> vector<8x128xf32>
    %13 = vector.broadcast %5 : vector<1x128xf32> to vector<8x128xf32>
    %14 = arith.addf %12, %13 : vector<8x128xf32>
    %cst_11 = arith.constant 0.000000e+00 : f32
    %15 = vector.broadcast %cst_11 : f32 to vector<8x128xf32>
    %16 = arith.maximumf %14, %15 : vector<8x128xf32>
    %cst_12 = arith.constant dense<0.000000e+00> : vector<8x128xf32>
    %17 = tpu.matmul %16, %3, %cst_12 {dimension_numbers = #tpu.dot_dimension_numbers<[1], [0], [0], [1], [0, 0, 1, 1], [], []>} : vector<8x128xf32>, vector<128x128xf32>, vector<8x128xf32> -> vector<8x128xf32>
    %18 = vector.broadcast %6 : vector<1x128xf32> to vector<8x128xf32>
    %19 = arith.addf %17, %18 : vector<8x128xf32>
    %cst_13 = arith.constant 0.000000e+00 : f32
    %20 = vector.broadcast %cst_13 : f32 to vector<8x128xf32>
    %21 = arith.maximumf %19, %20 : vector<8x128xf32>
    %c0_14 = arith.constant 0 : index
    %c0_15 = arith.constant 0 : index
    %22 = vector.load %arg4[%c0_14, %c0_15] : memref<8x128xf32, #tpu.memory_space<vmem>>, vector<8x128xf32>
    tpu.vector_store %arg4[%c0_14, %c0_15], %21 {strides = array<i32>} : memref<8x128xf32, #tpu.memory_space<vmem>>, vector<8x128xf32>,
    return
  }
  func.func @transform_0(%arg0: i32) -> (i32, i32) {
    %c0_i32 = arith.constant 0 : i32
    %c0_i32_0 = arith.constant 0 : i32
    return %arg0, %c0_i32 : i32, i32
  }
  func.func @transform_1(%arg0: i32) -> (i32, i32) {
    %c0_i32 = arith.constant 0 : i32
    %c0_i32_0 = arith.constant 0 : i32
    %c0_i32_1 = arith.constant 0 : i32
    return %c0_i32, %c0_i32_0 : i32, i32
  }
  func.func @transform_2(%arg0: i32) -> (i32, i32) {
    %c0_i32 = arith.constant 0 : i32
    %c0_i32_0 = arith.constant 0 : i32
    %c0_i32_1 = arith.constant 0 : i32
    return %c0_i32, %c0_i32_0 : i32, i32
  }
  func.func @transform_3(%arg0: i32) -> (i32, i32) {
    %c0_i32 = arith.constant 0 : i32
    %c0_i32_0 = arith.constant 0 : i32
    return %arg0, %c0_i32 : i32, i32
  }
}

</mosaic_0001>

<llo_original>
// kernel: tpu_custom_call.1
$region0: #{tpu_custom_call.1}
  #allocation0 [shape = 'u32[]', space=smem, size = 0x4, offset = 0x4, fixed_abs, tag = 'smem constant byte address 0x4 - core index']
  #allocation1 [shape = 'u32[72,128]{1,0:T(1,128)}', space=vmem, size = 0x9000, scoped, tag = 'internal scratch']
  %s0 = inlined_call_operand.hbm [shape: f32[8,16], index: 0, kind: input, shape index: {}]
  %s1 = inlined_call_operand.hbm [shape: f32[272,128], index: 1, kind: input, shape index: {}]
  %s2 = inlined_call_operand.hbm [shape: f32[8,128], index: 2, kind: input, shape index: {}]
  %s3 = inlined_call_operand.hbm [shape: f32[8,128], index: 3, kind: output, shape index: {}]
  %s4 = sld [smem:[#allocation0]]
  $region34: #{tpu_custom_call.1} parent=0
    _
  %s6 = ssub.s32 1, %s4
  %s7 = scalar_select 0, %s6, %s4
  $region1: #{tpu_custom_call.1} parent=0
    #allocation2 [shape = 'u8[4096]{0}', space=vmem, size = 0x1000, scoped, tag = 'input window, operand 0, single buffered']
    #allocation3 [shape = 's32[1]{0}', space=sflag, size = 0x4, scoped, tag = 'scoped memory for tpu_custom_call.1']
    #allocation4 [shape = 's32[1]{0}', space=sflag, size = 0x4, scoped, tag = 'scoped memory for tpu_custom_call.1']
    #allocation5 [shape = 'u8[139264]{0}', space=vmem, size = 0x22000, scoped, tag = 'input window, operand 1, single buffered']
    #allocation6 [shape = 's32[1]{0}', space=sflag, size = 0x4, scoped, tag = 'scoped memory for tpu_custom_call.1']
    #allocation7 [shape = 'u8[4096]{0}', space=vmem, size = 0x1000, scoped, tag = 'input window, operand 2, single buffered']
    #allocation8 [shape = 'u8[4096]{0}', space=vmem, size = 0x1000, scoped, tag = 'output window, operand 0, single buffered']
    %8 = vsyncpa [#allocation3], 0
    %9 = vsyncpa [#allocation6], 0
    %10 = vsyncpa [#allocation4], 0
    // Predicated region
    $region2: #{tpu_custom_call.1} parent=1 // pred_check
      _
    $region3: #{tpu_custom_call.1} parent=1 // pred_check_branch
      %12 = sbr.rel (0) target = $region5
    $region4: #{tpu_custom_call.1} parent=1 // pred_region
      %14 = vsyncadd [#allocation3], 0
      %s16 = sshll.u32 %s0, 4
      %s17 = int_to_ptr.hbm [resolvable:$true] %s16
      %s18 = sshll.u32 [#allocation2], 4
      %s19 = int_to_ptr.vmem [resolvable:$true] %s18
      %21 = dma.hbm_to_vmem [thread:$0]  %s17, 128, %s19, [#allocation3]
    $region5: #{tpu_custom_call.1} parent=1 // pred_fallthru
      _
    // Predicated region
    $region6: #{tpu_custom_call.1} parent=1 // pred_check
      _
    $region7: #{tpu_custom_call.1} parent=1 // pred_check_branch
      %23 = sbr.rel (0) target = $region9
    $region8: #{tpu_custom_call.1} parent=1 // pred_region
      %25 = vsyncadd [#allocation6], 0
      %s26 = sshll.u32 %s1, 4
      %s27 = int_to_ptr.hbm [resolvable:$true] %s26
      %s28 = sshll.u32 [#allocation5], 4
      %s29 = int_to_ptr.vmem [resolvable:$true] %s28
      %34 = dma.hbm_to_vmem [thread:$0]  %s27, 4352, %s29, [#allocation6], 128, 128, 8
    $region9: #{tpu_custom_call.1} parent=1 // pred_fallthru
      _
    // Predicated region
    $region10: #{tpu_custom_call.1} parent=1 // pred_check
      _
    $region11: #{tpu_custom_call.1} parent=1 // pred_check_branch
      %36 = sbr.rel (0) target = $region13
    $region12: #{tpu_custom_call.1} parent=1 // pred_region
      %38 = vsyncadd [#allocation6], 0
      %s40 = sshll.u32 %s2, 4
      %s41 = int_to_ptr.hbm [resolvable:$true] %s40
      %s42 = sshll.u32 [#allocation7], 4
      %s43 = int_to_ptr.vmem [resolvable:$true] %s42
      %45 = dma.hbm_to_vmem [thread:$0]  %s41, 128, %s43, [#allocation6]
    $region13: #{tpu_custom_call.1} parent=1 // pred_fallthru
      _
    // Predicated region
    $region14: #{tpu_custom_call.1} parent=1 // pred_check
      _
    $region15: #{tpu_custom_call.1} parent=1 // pred_check_branch
      %47 = sbr.rel (0) target = $region17
    $region16: #{tpu_custom_call.1} parent=1 // pred_region
      %49 = dma.done [#allocation3], 128
    $region17: #{tpu_custom_call.1} parent=1 // pred_fallthru
      _
    // Predicated region
    $region18: #{tpu_custom_call.1} parent=1 // pred_check
      _
    $region19: #{tpu_custom_call.1} parent=1 // pred_check_branch
      %51 = sbr.rel (0) target = $region21
    $region20: #{tpu_custom_call.1} parent=1 // pred_region
      %53 = dma.done [#allocation6], 4352
    $region21: #{tpu_custom_call.1} parent=1 // pred_fallthru
      _
    // Predicated region
    $region22: #{tpu_custom_call.1} parent=1 // pred_check
      _
    $region23: #{tpu_custom_call.1} parent=1 // pred_check_branch
      %55 = sbr.rel (0) target = $region25
    $region24: #{tpu_custom_call.1} parent=1 // pred_region
      %57 = dma.done [#allocation6], 128
    $region25: #{tpu_custom_call.1} parent=1 // pred_fallthru
      _
    %v58 = vld [vmem:[#allocation2] sm:$0xff]
    %v59 = vld [vmem:[#allocation5] sm:$0xff]
    %v60 = vld [vmem:[#allocation5 + $0x8] sm:$0xff]
    %v61 = vld [vmem:[#allocation5 + $0x10] sm:$0xff]
    %v62 = vld [vmem:[#allocation5 + $0x18] sm:$0xff]
    %v63 = vld [vmem:[#allocation5 + $0x20] sm:$0xff]
    %v64 = vld [vmem:[#allocation5 + $0x28] sm:$0xff]
    %v65 = vld [vmem:[#allocation5 + $0x30] sm:$0xff]
    %v66 = vld [vmem:[#allocation5 + $0x38] sm:$0xff]
    %v67 = vld [vmem:[#allocation5 + $0x40] sm:$0xff]
    %v68 = vld [vmem:[#allocation5 + $0x48] sm:$0xff]
    %v69 = vld [vmem:[#allocation5 + $0x50] sm:$0xff]
    %v70 = vld [vmem:[#allocation5 + $0x58] sm:$0xff]
    %v71 = vld [vmem:[#allocation5 + $0x60] sm:$0xff]
    %v72 = vld [vmem:[#allocation5 + $0x68] sm:$0xff]
    %v73 = vld [vmem:[#allocation5 + $0x70] sm:$0xff]
    %v74 = vld [vmem:[#allocation5 + $0x78] sm:$0xff]
    %v75 = vld [vmem:[#allocation5 + $0x80] sm:$0xff]
    %v76 = vld [vmem:[#allocation5 + $0x88] sm:$0xff]
    %v77 = vld [vmem:[#allocation5 + $0x90] sm:$0xff]
    %v78 = vld [vmem:[#allocation5 + $0x98] sm:$0xff]
    %v79 = vld [vmem:[#allocation5 + $0xa0] sm:$0xff]
    %v80 = vld [vmem:[#allocation5 + $0xa8] sm:$0xff]
    %v81 = vld [vmem:[#allocation5 + $0xb0] sm:$0xff]
    %v82 = vld [vmem:[#allocation5 + $0xb8] sm:$0xff]
    %v83 = vld [vmem:[#allocation5 + $0xc0] sm:$0xff]
    %v84 = vld [vmem:[#allocation5 + $0xc8] sm:$0xff]
    %v85 = vld [vmem:[#allocation5 + $0xd0] sm:$0xff]
    %v86 = vld [vmem:[#allocation5 + $0xd8] sm:$0xff]
    %v87 = vld [vmem:[#allocation5 + $0xe0] sm:$0xff]
    %v88 = vld [vmem:[#allocation5 + $0xe8] sm:$0xff]
    %v89 = vld [vmem:[#allocation5 + $0xf0] sm:$0xff]
    %v90 = vld [vmem:[#allocation5 + $0xf8] sm:$0xff]
    %v91 = vld [vmem:[#allocation5 + $0x100] sm:$0xff]
    %v92 = vld [vmem:[#allocation5 + $0x108] sm:$0xff]
    %v93 = vld [vmem:[#allocation7] sm:$0x1]
    %v94 = vld [vmem:[#allocation7 + $0x1] sm:$0x1]
    %v95 = vld [vmem:[#allocation7 + $0x2] sm:$0x1]
    %v96 = vperm.slane %v93, 0
    %vm97 = vcmask 130048
    %v99 = vsel %vm97, %v58, 0
    %101 = vmatpush.msra.mxu0 0.0
    %102 = vmatpush.msra.mxu0 0.0
    %103 = vmatpush.msra.mxu0 0.0
    %104 = vmatpush.msra.mxu0 0.0
    %105 = vmatpush.msra.mxu0 0.0
    %106 = vmatpush.msra.mxu0 0.0
    %107 = vmatpush.msra.mxu0 0.0
    %108 = vmatpush.msra.mxu0 0.0
    %109 = vmatpush.msra.mxu0 0.0
    %110 = vmatpush.msra.mxu0 0.0
    %111 = vmatpush.msra.mxu0 0.0
    %112 = vmatpush.msra.mxu0 0.0
    %113 = vmatpush.msra.mxu0 0.0
    %114 = vmatpush.msra.mxu0 0.0
    %115 = vmatpush.msra.mxu0 %v60
    %116 = vmatpush.msra.mxu0 %v59
    %117 = vmatmul.f32.gmra.mxu0 %v99
    %v118 = vpop.f32.mrf.mxu0
    %v119 = vadd.f32 %v96, %v118
    %120 = vdwg.mxu0
    %v121 = vmax.f32 %v119, 0.0
    %v122 = vperm.slane %v94, 0
    %123 = vmatpush.msra.mxu0 %v76
    %124 = vmatpush.msra.mxu0 %v75
    %125 = vmatpush.msra.mxu0 %v74
    %126 = vmatpush.msra.mxu0 %v73
    %127 = vmatpush.msra.mxu0 %v72
    %128 = vmatpush.msra.mxu0 %v71
    %129 = vmatpush.msra.mxu0 %v70
    %130 = vmatpush.msra.mxu0 %v69
    %131 = vmatpush.msra.mxu0 %v68
    %132 = vmatpush.msra.mxu0 %v67
    %133 = vmatpush.msra.mxu0 %v66
    %134 = vmatpush.msra.mxu0 %v65
    %135 = vmatpush.msra.mxu0 %v64
    %136 = vmatpush.msra.mxu0 %v63
    %137 = vmatpush.msra.mxu0 %v62
    %138 = vmatpush.msra.mxu0 %v61
    %139 = vmatmul.f32.gmra.mxu0 %v121
    %v140 = vpop.f32.mrf.mxu0
    %v141 = vadd.f32 %v122, %v140
    %142 = vdwg.mxu0
    %v143 = vmax.f32 %v141, 0.0
    %v144 = vperm.slane %v95, 0
    %145 = vmatpush.msra.mxu0 %v92
    %146 = vmatpush.msra.mxu0 %v91
    %147 = vmatpush.msra.mxu0 %v90
    %148 = vmatpush.msra.mxu0 %v89
    %149 = vmatpush.msra.mxu0 %v88
    %150 = vmatpush.msra.mxu0 %v87
    %151 = vmatpush.msra.mxu0 %v86
    %152 = vmatpush.msra.mxu0 %v85
    %153 = vmatpush.msra.mxu0 %v84
    %154 = vmatpush.msra.mxu0 %v83
    %155 = vmatpush.msra.mxu0 %v82
    %156 = vmatpush.msra.mxu0 %v81
    %157 = vmatpush.msra.mxu0 %v80
    %158 = vmatpush.msra.mxu0 %v79
    %159 = vmatpush.msra.mxu0 %v78
    %160 = vmatpush.msra.mxu0 %v77
    %161 = vmatmul.f32.gmra.mxu0 %v143
    %v162 = vpop.f32.mrf.mxu0
    %v163 = vadd.f32 %v144, %v162
    %164 = vdwg.mxu0
    %v165 = vmax.f32 %v163, 0.0
    %166 = vst [vmem:[#allocation8] sm:$0xff] %v165
    // Predicated region
    $region26: #{tpu_custom_call.1} parent=1 // pred_check
      _
    $region27: #{tpu_custom_call.1} parent=1 // pred_check_branch
      %168 = sbr.rel (0) target = $region29
    $region28: #{tpu_custom_call.1} parent=1 // pred_region
      %170 = vsyncadd [#allocation4], 0
      %s172 = sshll.u32 [#allocation8], 4
      %s173 = int_to_ptr.vmem [resolvable:$true] %s172
      %s174 = sshll.u32 %s3, 4
      %s175 = int_to_ptr.hbm [resolvable:$true] %s174
      %177 = dma.vmem_to_hbm [thread:$0]  %s173, 128, %s175, [#allocation4]
    $region29: #{tpu_custom_call.1} parent=1 // pred_fallthru
      _
    // Predicated region
    $region30: #{tpu_custom_call.1} parent=1 // pred_check
      _
    $region31: #{tpu_custom_call.1} parent=1 // pred_check_branch
      %179 = sbr.rel (0) target = $region33
    $region32: #{tpu_custom_call.1} parent=1 // pred_region
      %181 = dma.done [#allocation4], 128
    $region33: #{tpu_custom_call.1} parent=1 // pred_fallthru
      _
    %182 = vsyncpa [#allocation3], 1
    %183 = vsyncpa [#allocation6], 1
    %184 = vsyncpa [#allocation4], 1

</llo_original>
